<compile_context>
chip_gen: v7x
topology: tpu7x:2x2x1
jax: 0.10.0
libtpu: 0.0.40
codegen_flags: <defaults>
</compile_context>

<pallas_src>
from collections import namedtuple

import jax
import jax.numpy as jnp
from jax import lax
from jax.experimental import pallas as pl
from jax.experimental.pallas import tpu as pltpu


# Leading "parallel" grid axis of the fused loss kernel (v7x has 2 TCs/chip;
# harmless on single-TC v5e/v6e).
_NUM_LOSS_CORES = 2


# ----------------------------------------------------------------------------
# Small helpers
# ----------------------------------------------------------------------------
def _round_up(x, m):
    return ((x + m - 1) // m) * m


def _pad_to(a, rows, cols):
    r, c = a.shape
    if r == rows and c == cols:
        return a
    return jnp.pad(a, ((0, rows - r), (0, cols - c)))


def _choose_block_m(m, num_cores=_NUM_LOSS_CORES, cap=1024):
    # Per-core row tile: big enough to amortize the ~0.35us/step overhead,
    # small enough that the f32 epilogue intermediates stay far below the
    # scoped-VMEM default on every generation (incl. v5e's 16 MiB).
    per_core = (m + num_cores - 1) // num_cores
    return min(cap, _round_up(per_core, 16))


def _init_conv1x1_params(key, cin, cout, scale=0.05):
    kw, kb = jax.random.split(key)
    w = scale * jax.random.normal(kw, (cout, cin), dtype=jnp.float32)
    b = scale * jax.random.normal(kb, (cout,), dtype=jnp.float32)
    return w, b


def _prep_pred_params(weight, bias, cin_pad):
    """torch-layout (Cout, Cin)/(Cout,) -> kernel-ready (Cin_pad, Cout_pad) bf16
    weight and (1, Cout_pad) f32 bias, Cout padded to a multiple of 128 so all
    stores/epilogue lanes stay dense."""
    cout = weight.shape[0]
    cout_p = _round_up(cout, 128)
    w_rows = _pad_to(jnp.transpose(weight).astype(jnp.bfloat16), cin_pad, cout_p)
    b_rows = _pad_to(bias.reshape(1, cout).astype(jnp.float32), 1, cout_p)
    return w_rows, b_rows


# ----------------------------------------------------------------------------
# Pallas kernel 1: plain row-tiled 1x1 conv (inference / prediction path)
# ----------------------------------------------------------------------------
def _matmul_bias_kernel(x_ref, w_ref, b_ref, o_ref):
    # x: (bm, K) bf16, w: (K, Np) bf16, b: (1, Np) f32 -> o: (bm, Np)
    acc = jnp.dot(x_ref[...], w_ref[...], preferred_element_type=jnp.float32)
    o_ref[...] = (acc + b_ref[...]).astype(o_ref.dtype)


def matmul_bias_rows(x_p, w_p, b_p, block_m, out_dtype=jnp.float32):
    """Row-tiled 1x1 conv on padded rows: (Mp, K) @ (K, Np) + (1, Np)."""
    m_p, k = x_p.shape
    n_p = w_p.shape[1]
    grid = (m_p // block_m,)
    return pl.pallas_call(
        _matmul_bias_kernel,
        out_shape=jax.ShapeDtypeStruct((m_p, n_p), out_dtype),
        grid_spec=pltpu.PrefetchScalarGridSpec(
            num_scalar_prefetch=0,
            grid=grid,
            in_specs=[
                pl.BlockSpec((block_m, k), lambda i: (i, 0)),
                pl.BlockSpec((k, n_p), lambda i: (0, 0)),
                pl.BlockSpec((1, n_p), lambda i: (0, 0)),
            ],
            out_specs=pl.BlockSpec((block_m, n_p), lambda i: (i, 0)),
        ),
        compiler_params=pltpu.CompilerParams(dimension_semantics=("parallel",)),
    )(x_p, w_p, b_p)


# ----------------------------------------------------------------------------
# Pallas kernel 2: fused dual-head prediction conv + surrogate-loss partials
# ----------------------------------------------------------------------------
def _make_dual_pred_loss_kernel(block_m, n_valid, steps_per_core):
    """One matmul per step over BOTH heads (N = 256: head lanes [0,128),
    extra-head lanes [128,256)) plus a cheap per-lane epilogue.

    The per-core resident output block is (24, Np) f32:
        rows  0.. 7 : per-lane sums of (pred - target_box)^2   (masked rows)
        rows  8..15 : per-lane sums of |pred - target_box|
        rows 16..23 : per-lane sums of sigmoid(pred)^2
    Lane identity decides which loss a column feeds, so no per-column masks or
    cross-lane reductions are needed inside the kernel."""

    def kernel(x_ref, w_ref, b_ref, tb_ref, o_ref):
        i = pl.program_id(1)

        @pl.when(i == 0)
        def _():
            o_ref[...] = jnp.zeros_like(o_ref)

        p = jnp.dot(x_ref[...], w_ref[...], preferred_element_type=jnp.float32)
        p = p + b_ref[...]
        n_p = p.shape[-1]

        # Row mask only (padded rows); column selection happens at finalize
        # time (in the wrapper) via lane indices.
        row0 = (pl.program_id(0) * steps_per_core + i) * block_m
        row = row0 + lax.broadcasted_iota(jnp.int32, p.shape, 0)
        rmask = row < n_valid

        zero = jnp.zeros_like(p)
        d = p - tb_ref[...]              # target box broadcast in-kernel
        sq = jnp.where(rmask, d * d, zero)
        ab = jnp.where(rmask, jnp.abs(d), zero)
        s = jax.nn.sigmoid(p)
        s2 = jnp.where(rmask, s * s, zero)

        def fold(v):
            # (block_m, Np) -> (8, Np): sublane-aligned vreg adds only
            # (no XLU lane/sublane reductions on the per-step critical path).
            return jnp.sum(v.reshape(block_m // 8, 8, n_p), axis=0)

        partial = jnp.concatenate([fold(sq), fold(ab), fold(s2)], axis=0)  # (24, Np)
        o_ref[...] = o_ref[...] + partial

    return kernel


def dual_pred_loss_sums(x_p, n_valid, w_p, b_p, tb_p, block_m,
                        num_cores=_NUM_LOSS_CORES):
    """Fused dual-head prediction conv + loss partial sums for one FPN level.

    Returns per-lane sums of shape (3, Np) f32:
        [0] sum (p - tb)^2, [1] sum |p - tb|, [2] sum sigmoid(p)^2
    reduced over the n_valid rows.  The (M, 2*85) predictions never leave VMEM.
    """
    m_p, k = x_p.shape
    n_p = w_p.shape[1]
    steps_per_core = m_p // (num_cores * block_m)
    assert steps_per_core * num_cores * block_m == m_p

    out = pl.pallas_call(
        _make_dual_pred_loss_kernel(block_m, n_valid, steps_per_core),
        out_shape=jax.ShapeDtypeStruct((num_cores, 24, n_p), jnp.float32),
        grid_spec=pltpu.PrefetchScalarGridSpec(
            num_scalar_prefetch=0,
            grid=(num_cores, steps_per_core),
            in_specs=[
                pl.BlockSpec((block_m, k),
                             lambda c, i: (c * steps_per_core + i, 0)),
                pl.BlockSpec((k, n_p), lambda c, i: (0, 0)),
                pl.BlockSpec((1, n_p), lambda c, i: (0, 0)),
                pl.BlockSpec((1, n_p), lambda c, i: (0, 0)),
            ],
            # per-core resident accumulator block; cores own distinct blocks
            out_specs=pl.BlockSpec((None, 24, n_p), lambda c, i: (c, 0, 0)),
        ),
        compiler_params=pltpu.CompilerParams(
            dimension_semantics=("parallel", "arbitrary")),
    )(x_p, w_p, b_p, tb_p)

    # Tiny finalize (num_cores x 24 x Np) done in plain JAX.
    return jnp.sum(out.reshape(num_cores, 3, 8, n_p), axis=(0, 2))  # (3, Np)


# ----------------------------------------------------------------------------
# Feature container (padded rows form)
# ----------------------------------------------------------------------------
LevelFeat = namedtuple(
    "LevelFeat", ["rows", "n_rows", "n_ch", "batch", "h", "w", "block_m"]
)


# ----------------------------------------------------------------------------
# Simplified submodules (deterministic, in-script parameters)
# ----------------------------------------------------------------------------
class SimpleBackbone:
    """Stand-in for YOLOPAFPN: average-pool to strides (8, 16, 32) and project
    3 -> fpn channels; features are produced directly in padded rows/NHWC form
    (no NCHW round trips before the prediction kernels)."""

    def __init__(self, key, width):
        self.strides = (8, 16, 32)
        self.out_channels = tuple(int(c * width) for c in (256, 512, 1024))
        keys = jax.random.split(key, 3)
        self.params = [
            _init_conv1x1_params(k, 3, c) for k, c in zip(keys, self.out_channels)
        ]

    def __call__(self, x):
        B, C, H, W = x.shape
        feats = []
        for (w, b), s, cout in zip(self.params, self.strides, self.out_channels):
            h, wd = H // s, W // s
            # TODO(synk): pooling + K=3 projection are stand-ins done in plain
            # JAX; as a Pallas matmul the K=3 contraction is lane-sparse and
            # MXU-starved, so Pallas starts at the prediction stage.
            pooled = x.reshape(B, C, h, s, wd, s).mean(axis=(3, 5))
            rows = jnp.transpose(pooled, (0, 2, 3, 1)).reshape(B * h * wd, C)
            proj = rows @ jnp.transpose(w) + b            # (m, cout) f32
            m = proj.shape[0]
            bm = _choose_block_m(m)
            m_p = _round_up(m, _NUM_LOSS_CORES * bm)
            c_p = _round_up(cout, 128)
            rows_p = _pad_to(proj.astype(jnp.bfloat16), m_p, c_p)
            feats.append(LevelFeat(rows_p, m, cout, B, h, wd, bm))
        return tuple(feats)


class SimpleYOLOXHead:
    """Stand-in for YOLOXHead(num_classes): one 1x1 prediction conv per level.
    Inference uses the row-tiled Pallas matmul; training goes through the
    fused dual-head loss kernel owned by YOLOXDualHeadPallas."""

    def __init__(self, key, num_classes=80, width=1.0):
        self.num_classes = num_classes
        self.width = width
        self.in_channels = tuple(int(c * width) for c in (256, 512, 1024))
        nout = num_classes + 5
        keys = jax.random.split(key, 3)
        self.raw_params = [
            _init_conv1x1_params(k, cin, nout)
            for k, cin in zip(keys, self.in_channels)
        ]
        self.pred_params = [
            _prep_pred_params(w, b, cin_pad=_round_up(cin, 128))
            for (w, b), cin in zip(self.raw_params, self.in_channels)
        ]

    def predict(self, level_feats):
        nout = self.num_classes + 5
        preds = []
        for lf, (w_p, b_p) in zip(level_feats, self.pred_params):
            rows = matmul_bias_rows(lf.rows, w_p, b_p, lf.block_m,
                                    out_dtype=jnp.float32)
            preds.append(
                rows[: lf.n_rows, :nout].reshape(lf.batch, lf.h * lf.w, nout))
        return jnp.concatenate(preds, axis=1)


# ----------------------------------------------------------------------------
# YOLOXDualHead
# ----------------------------------------------------------------------------
class YOLOXDualHeadPallas:
    def __init__(self, key, num_classes=80, width=0.25, extra_width=0.25):
        k_bb, k_h, k_eh, k_up = jax.random.split(key, 4)
        self.num_classes = num_classes
        self.backbone = SimpleBackbone(k_bb, width)
        self.head = SimpleYOLOXHead(k_h, num_classes, width)
        self.extra_head = SimpleYOLOXHead(k_eh, num_classes, extra_width)

        # up_channels: three 1x1 convs head-width -> extra-head-width
        up_keys = jax.random.split(k_up, 3)
        self.up_params = [
            _init_conv1x1_params(k, int(c * width), int(c * extra_width))
            for k, c in zip(up_keys, (256, 512, 1024))
        ]

        # Fold up_channels (1x1) and the extra head's prediction conv (1x1)
        # into one matmul, then CONCATENATE with the main head's prediction
        # conv along N so one (K, 256) matmul serves both heads per level:
        #   pred_extra = x @ (W_pe @ W_up)^T + (W_pe @ b_up + b_pe)
        # TODO(synk): the fold is valid only because the simplified extra head
        # has no BN/activation between up_channels and its prediction conv
        # (the real YOLOXDualHead has Conv+BN+act there).
        self.fused_pred_params = []
        for (w_up, b_up), (w_pe, b_pe), (wh_p, bh_p), cin_h in zip(
            self.up_params, self.extra_head.raw_params,
            self.head.pred_params, self.head.in_channels,
        ):
            w_eff = w_pe @ w_up          # (85, cin_head)
            b_eff = w_pe @ b_up + b_pe   # (85,)
            we_p, be_p = _prep_pred_params(
                w_eff, b_eff, cin_pad=_round_up(cin_h, 128))
            self.fused_pred_params.append(
                (jnp.concatenate([wh_p, we_p], axis=1),   # (K, 256) bf16
                 jnp.concatenate([bh_p, be_p], axis=1)))  # (1, 256) f32

    # -- surrogate training losses: one fused conv+reduction kernel per level
    def _train_losses(self, level_feats, targets):
        nc = self.num_classes
        half = _round_up(nc + 5, 128)   # 128: head lanes [0,128), extra [128,256)
        n_p = 2 * half

        boxes = targets[..., 1:5]                                   # (B, max_objs, 4)
        valid_f = ((boxes[..., 2] * boxes[..., 3]) > 0.0).astype(jnp.float32)
        num_fg = jnp.maximum(jnp.sum(valid_f), 1.0)
        mean_box = jnp.sum(boxes * valid_f[..., None], axis=(0, 1)) / num_fg
        tb = jnp.zeros((1, n_p), jnp.float32)
        tb = tb.at[0, 0:4].set(mean_box).at[0, half:half + 4].set(mean_box)

        sums = jnp.zeros((3, n_p), jnp.float32)
        n_reg = n_obj = n_cls = 0
        for lf, (w_f, b_f) in zip(level_feats, self.fused_pred_params):
            sums = sums + dual_pred_loss_sums(
                lf.rows, lf.n_rows, w_f, b_f, tb, lf.block_m)
            n_reg += lf.n_rows * 4
            n_obj += lf.n_rows
            n_cls += lf.n_rows * nc

        def finish(off):
            iou_loss = jnp.sum(sums[0, off:off + 4]) / n_reg
            l1_loss = jnp.sum(sums[1, off:off + 4]) / n_reg
            conf_loss = sums[2, off + 4] / n_obj
            cls_loss = jnp.sum(sums[2, off + 5:off + 5 + nc]) / n_cls
            total = 5.0 * iou_loss + conf_loss + cls_loss + l1_loss
            return total, iou_loss, conf_loss, cls_loss, l1_loss

        loss, iou_loss, conf_loss, cls_loss, l1_loss = finish(0)
        (extra_loss, extra_iou_loss, extra_conf_loss,
         extra_cls_loss, extra_l1_loss) = finish(half)

        return {
            "total_loss": 0.2 * loss + 0.8 * extra_loss,
            "loss": loss,
            "iou_loss": iou_loss,
            "l1_loss": l1_loss,
            "conf_loss": conf_loss,
            "cls_loss": cls_loss,
            "num_fg": num_fg,
            "extra_loss": extra_loss,
            "extra_iou_loss": extra_iou_loss,
            "extra_l1_loss": extra_l1_loss,
            "extra_conf_loss": extra_conf_loss,
            "extra_cls_loss": extra_cls_loss,
            "extra_num_fg": num_fg,
        }

    def __call__(self, x, targets=None, training=True):
        level_feats = self.backbone(x)
        if training:
            assert targets is not None
            return self._train_losses(level_feats, targets)
        return self.head.predict(level_feats)


# ----------------------------------------------------------------------------
# Demo
# ----------------------------------------------------------------------------
if __name__ == "__main__":
    key = jax.random.PRNGKey(0)
    k_model, k_x, k_t = jax.random.split(key, 3)

    # small, deterministic inputs
    x = jax.random.normal(k_x, (2, 3, 32, 32), dtype=jnp.float32)  # NCHW image
    # targets: (B, max_objs, 5) = (cls, cx, cy, w, h), positive boxes
    targets = jnp.abs(jax.random.normal(k_t, (2, 4, 5), dtype=jnp.float32)) * 8.0

    model = YOLOXDualHeadPallas(k_model, num_classes=80, width=0.25,
                                extra_width=0.25)

    # training path (fused dual-head prediction + loss kernel)
    outputs = model(x, targets, training=True)
    jax.block_until_ready(outputs["total_loss"])
    for name in ("total_loss", "loss", "extra_loss", "num_fg", "extra_num_fg"):
        _ = float(outputs[name])  # force materialization

    # inference path (row-tiled prediction matmul kernel)
    preds = model(x, training=False)
    jax.block_until_ready(preds)

    print("KERNEL_OK")
</pallas_src>

<mosaic_0001>
module attributes {stable_mosaic.version = 11 : i64} {
  func.func @kernel(%arg0: i32, %arg1: i32, %arg2: memref<16x128xbf16, #tpu.memory_space<vmem>>, %arg3: memref<128x256xbf16, #tpu.memory_space<vmem>>, %arg4: memref<1x256xf32, #tpu.memory_space<vmem>>, %arg5: memref<1x256xf32, #tpu.memory_space<vmem>>, %arg6: memref<1x24x256xf32, #tpu.memory_space<vmem>>) attributes {dimension_semantics = [#tpu.dimension_semantics<parallel>, #tpu.dimension_semantics<arbitrary>], iteration_bounds = array<i64: 2, 1>, scalar_prefetch = 0 : i64, scratch_operands = 0 : i64, tpu.core_type = #tpu.core_type<tc>, window_params = [{transform_indices = @transform_0, window_bounds = array<i64: 16, 128>}, {pipeline_mode = #tpu.pipeline_mode<synchronous>, transform_indices = @transform_1, window_bounds = array<i64: 128, 256>}, {pipeline_mode = #tpu.pipeline_mode<synchronous>, transform_indices = @transform_2, window_bounds = array<i64: 1, 256>}, {pipeline_mode = #tpu.pipeline_mode<synchronous>, transform_indices = @transform_3, window_bounds = array<i64: 1, 256>}, {transform_indices = @transform_4, window_bounds = array<i64: 1, 24, 256>}]} {
    %c0_i32 = arith.constant 0 : i32
    %0 = arith.cmpi eq, %arg1, %c0_i32 : i32
    %1 = arith.extui %0 : i1 to i32
    %c0_i32_0 = arith.constant 0 : i32
    %2 = arith.cmpi ne, %1, %c0_i32_0 : i32
    scf.if %2 {
      %cst_19 = arith.constant 0.000000e+00 : f32
      %45 = vector.broadcast %cst_19 : f32 to vector<24x256xf32>
      %c0_20 = arith.constant 0 : index
      %c0_21 = arith.constant 0 : index
      %c0_22 = arith.constant 0 : index
      %46 = vector.load %arg6[%c0_20, %c0_21, %c0_22] : memref<1x24x256xf32, #tpu.memory_space<vmem>>, vector<1x24x256xf32>
      %47 = vector.shape_cast %46 : vector<1x24x256xf32> to vector<24x256xf32>
      %48 = vector.shape_cast %45 : vector<24x256xf32> to vector<1x24x256xf32>
      tpu.vector_store %arg6[%c0_20, %c0_21, %c0_22], %48 {strides = array<i32>} : memref<1x24x256xf32, #tpu.memory_space<vmem>>, vector<1x24x256xf32>,
    } else {
    }
    %c0 = arith.constant 0 : index
    %c0_1 = arith.constant 0 : index
    %3 = vector.load %arg2[%c0, %c0_1] : memref<16x128xbf16, #tpu.memory_space<vmem>>, vector<16x128xbf16>
    %c0_2 = arith.constant 0 : index
    %c0_3 = arith.constant 0 : index
    %4 = vector.load %arg3[%c0_2, %c0_3] : memref<128x256xbf16, #tpu.memory_space<vmem>>, vector<128x256xbf16>
    %cst = arith.constant dense<0.000000e+00> : vector<16x256xf32>
    %5 = tpu.matmul %3, %4, %cst {dimension_numbers = #tpu.dot_dimension_numbers<[1], [0], [0], [1], [0, 0, 1, 1], [], []>} : vector<16x128xbf16>, vector<128x256xbf16>, vector<16x256xf32> -> vector<16x256xf32>
    %c0_4 = arith.constant 0 : index
    %c0_5 = arith.constant 0 : index
    %6 = vector.load %arg4[%c0_4, %c0_5] : memref<1x256xf32, #tpu.memory_space<vmem>>, vector<1x256xf32>
    %7 = vector.broadcast %6 : vector<1x256xf32> to vector<16x256xf32>
    %8 = arith.addf %5, %7 : vector<16x256xf32>
    %c1_i32 = arith.constant 1 : i32
    %9 = arith.muli %arg0, %c1_i32 : i32
    %10 = arith.addi %9, %arg1 : i32
    %c16_i32 = arith.constant 16 : i32
    %11 = arith.muli %10, %c16_i32 : i32
    %12 = tpu.iota {dimensions = array<i32: 0>} : vector<16x256xi32>
    %13 = vector.broadcast %11 : i32 to vector<16x256xi32>
    %14 = arith.addi %13, %12 : vector<16x256xi32>
    %c32_i32 = arith.constant 32 : i32
    %15 = vector.broadcast %c32_i32 : i32 to vector<16x256xi32>
    %16 = arith.cmpi slt, %14, %15 : vector<16x256xi32>
    %cst_6 = arith.constant 0.000000e+00 : f32
    %17 = vector.broadcast %cst_6 : f32 to vector<16x256xf32>
    %c0_7 = arith.constant 0 : index
    %c0_8 = arith.constant 0 : index
    %18 = vector.load %arg5[%c0_7, %c0_8] : memref<1x256xf32, #tpu.memory_space<vmem>>, vector<1x256xf32>
    %19 = vector.broadcast %18 : vector<1x256xf32> to vector<16x256xf32>
    %20 = arith.subf %8, %19 : vector<16x256xf32>
    %21 = arith.mulf %20, %20 : vector<16x256xf32>
    %22 = arith.select %16, %21, %17 : vector<16x256xi1>, vector<16x256xf32>
    %23 = math.absf %20 : vector<16x256xf32>
    %24 = arith.select %16, %23, %17 : vector<16x256xi1>, vector<16x256xf32>
    %25 = arith.negf %8 : vector<16x256xf32>
    %26 = math.exp %25 : vector<16x256xf32>
    %cst_9 = arith.constant 1.000000e+00 : f32
    %27 = vector.broadcast %cst_9 : f32 to vector<16x256xf32>
    %28 = arith.addf %27, %26 : vector<16x256xf32>
    %29 = arith.divf %27, %28 : vector<16x256xf32>
    %30 = arith.mulf %29, %29 : vector<16x256xf32>
    %31 = arith.select %16, %30, %17 : vector<16x256xi1>, vector<16x256xf32>
    %32 = vector.shape_cast %22 : vector<16x256xf32> to vector<2x8x256xf32>
    %cst_10 = arith.constant dense<0.000000e+00> : vector<8x256xf32>
    %33 = vector.multi_reduction <add>, %32, %cst_10 [0] : vector<2x8x256xf32> to vector<8x256xf32>
    %34 = vector.shape_cast %24 : vector<16x256xf32> to vector<2x8x256xf32>
    %cst_11 = arith.constant dense<0.000000e+00> : vector<8x256xf32>
    %35 = vector.multi_reduction <add>, %34, %cst_11 [0] : vector<2x8x256xf32> to vector<8x256xf32>
    %36 = vector.shape_cast %31 : vector<16x256xf32> to vector<2x8x256xf32>
    %cst_12 = arith.constant dense<0.000000e+00> : vector<8x256xf32>
    %37 = vector.multi_reduction <add>, %36, %cst_12 [0] : vector<2x8x256xf32> to vector<8x256xf32>
    %38 = tpu.concatenate %33, %35, %37 in 0 : vector<8x256xf32>, vector<8x256xf32>, vector<8x256xf32> -> vector<24x256xf32>
    %c0_13 = arith.constant 0 : index
    %c0_14 = arith.constant 0 : index
    %c0_15 = arith.constant 0 : index
    %39 = vector.load %arg6[%c0_13, %c0_14, %c0_15] : memref<1x24x256xf32, #tpu.memory_space<vmem>>, vector<1x24x256xf32>
    %40 = vector.shape_cast %39 : vector<1x24x256xf32> to vector<24x256xf32>
    %41 = arith.addf %40, %38 : vector<24x256xf32>
    %c0_16 = arith.constant 0 : index
    %c0_17 = arith.constant 0 : index
    %c0_18 = arith.constant 0 : index
    %42 = vector.load %arg6[%c0_16, %c0_17, %c0_18] : memref<1x24x256xf32, #tpu.memory_space<vmem>>, vector<1x24x256xf32>
    %43 = vector.shape_cast %42 : vector<1x24x256xf32> to vector<24x256xf32>
    %44 = vector.shape_cast %41 : vector<24x256xf32> to vector<1x24x256xf32>
    tpu.vector_store %arg6[%c0_16, %c0_17, %c0_18], %44 {strides = array<i32>} : memref<1x24x256xf32, #tpu.memory_space<vmem>>, vector<1x24x256xf32>,
    return
  }
  func.func @transform_0(%arg0: i32, %arg1: i32) -> (i32, i32) {
    %c1_i32 = arith.constant 1 : i32
    %0 = arith.muli %arg0, %c1_i32 : i32
    %1 = arith.addi %0, %arg1 : i32
    %c0_i32 = arith.constant 0 : i32
    %c0_i32_0 = arith.constant 0 : i32
    return %1, %c0_i32 : i32, i32
  }
  func.func @transform_1(%arg0: i32, %arg1: i32) -> (i32, i32) {
    %c0_i32 = arith.constant 0 : i32
    %c0_i32_0 = arith.constant 0 : i32
    %c0_i32_1 = arith.constant 0 : i32
    return %c0_i32, %c0_i32_0 : i32, i32
  }
  func.func @transform_2(%arg0: i32, %arg1: i32) -> (i32, i32) {
    %c0_i32 = arith.constant 0 : i32
    %c0_i32_0 = arith.constant 0 : i32
    %c0_i32_1 = arith.constant 0 : i32
    return %c0_i32, %c0_i32_0 : i32, i32
  }
  func.func @transform_3(%arg0: i32, %arg1: i32) -> (i32, i32) {
    %c0_i32 = arith.constant 0 : i32
    %c0_i32_0 = arith.constant 0 : i32
    %c0_i32_1 = arith.constant 0 : i32
    return %c0_i32, %c0_i32_0 : i32, i32
  }
  func.func @transform_4(%arg0: i32, %arg1: i32) -> (i32, i32, i32) {
    %c0_i32 = arith.constant 0 : i32
    %c0_i32_0 = arith.constant 0 : i32
    %c0_i32_1 = arith.constant 0 : i32
    return %arg0, %c0_i32, %c0_i32_0 : i32, i32, i32
  }
}

</mosaic_0001>

<llo_original>
// kernel: tpu_custom_call.1
$region0: #{tpu_custom_call.1}
  #allocation0 [shape = 'u32[]', space=smem, size = 0x4, offset = 0x4, fixed_abs, tag = 'smem constant byte address 0x4 - core index']
  #allocation1 [shape = 'u32[144,128]{1,0:T(1,128)}', space=vmem, size = 0x12000, scoped, tag = 'internal scratch']
  %s0 = inlined_call_operand.hbm [shape: bf16[32,128], index: 0, kind: input, shape index: {}]
  %s1 = inlined_call_operand.hbm [shape: bf16[128,256], index: 1, kind: input, shape index: {}]
  %s2 = inlined_call_operand.vmem [shape: f32[1,256], index: 2, kind: input, shape index: {}]
  %s3 = inlined_call_operand.vmem [shape: f32[1,256], index: 3, kind: input, shape index: {}]
  %s4 = inlined_call_operand.hbm [shape: f32[2,24,256], index: 4, kind: output, shape index: {}]
  %s5 = sld [smem:[#allocation0]]
  $region61: #{tpu_custom_call.1} parent=0
    _
  %s7 = ssub.s32 1, %s5
  %s8 = scalar_select 0, %s7, %s5
  $region1: #{tpu_custom_call.1} parent=0
    #allocation2 [shape = 'u8[8192]{0}', space=vmem, size = 0x2000, scoped, tag = 'input window, operand 0']
    #allocation3 [shape = 's32[2]{0}', space=sflag, size = 0x8, scoped, tag = 'scoped memory for tpu_custom_call.1']
    #allocation4 [shape = 's32[2]{0}', space=sflag, size = 0x8, scoped, tag = 'scoped memory for tpu_custom_call.1']
    #allocation5 [shape = 'u8[65536]{0}', space=vmem, size = 0x10000, scoped, tag = 'input window, operand 1, single buffered']
    #allocation6 [shape = 's32[1]{0}', space=sflag, size = 0x4, scoped, tag = 'scoped memory for tpu_custom_call.1']
    #allocation7 [shape = 'u8[49152]{0}', space=vmem, size = 0xc000, scoped, tag = 'output window, operand 0']
    %9 = vsyncpa [#allocation3], 0
    %s10 = scalar_lea.sflag [#allocation3], 1
    %11 = vsyncpa %s10, 0
    %12 = vsyncpa [#allocation6], 0
    %13 = vsyncpa [#allocation4], 0
    %s14 = scalar_lea.sflag [#allocation4], 1
    %15 = vsyncpa %s14, 0
    loop: start=0, step=1, limit=4
    $region2: #{tpu_custom_call.1} parent=1 // loop_pre_header
      _
    $region3: #{tpu_custom_call.1} parent=1 // loop_header
      %s17 = sphi 0, %s21
      %p18 = scmp.ge.s32.totalorder %s17, 4
      %s24 = sphi 0, %s36
      %s25 = sphi 0, %s32
      %s26 = sphi 0, %s24
      %s27 = sphi 0, %s25
      %s28 = sphi 0, %s26
      %s29 = sphi 0, %s27
      %s41 = sphi 0, %s43
      %s44 = sphi 0, %s41
      %s45 = sphi 0, %s44
      %s61 = sphi 0, %s45
      %s65 = sphi 0, %s65
      %s67 = sphi 0, %s65
      %s68 = sphi 0, %s67
      %s82 = sphi 0, %s68
      %s86 = sphi 0, %s86
      %s88 = sphi 0, %s86
      %s89 = sphi 0, %s88
      %s103 = sphi 0, %s89
      %s107 = sphi 0, %s107
      %s109 = sphi 0, %s107
      %s110 = sphi 0, %s109
      %s124 = sphi 0, %s110
      %s130 = sphi 0, %s132
      %s133 = sphi 0, %s130
      %s134 = sphi 0, %s133
      %s150 = sphi 0, %s134
    $region4: #{tpu_custom_call.1} parent=1 // loop_header_branch
      %20 = sbr.rel (%p18) target = $region8
    $region5: #{tpu_custom_call.1} parent=1 // loop_body
      %s22 = ssub.s32 %s17, 1
      %s23 = ssub.s32 %s17, 2
      %s30 = sadd.s32 1, %s25
      %p31 = scmp.ge.s32.totalorder %s30, 1
      %s32 = scalar_select %p31, 0, %s30
      %s33 = sadd.s32 1, %s24
      %s34 = scalar_select %p31, %s33, %s24
      %p35 = scmp.ge.s32.totalorder %s34, 2
      %s36 = scalar_select %p35, 0, %s34
      %s37 = sadd.s32 %s24, %s25
      %s38 = sadd.s32 %s36, %s32
      %s39 = ssub.s32 %s37, %s38
      %p40 = scmp.eq.s32.totalorder %s39, 0
      %s42 = sadd.s32 %s41, 1
      %s43 = scalar_select %p40, %s41, %s42
      %p46 = pneg %p40
      %p47 = scmp.eq.s32.totalorder %s17, 1
      %p48 = por %p46, %p47
      %p49 = scmp.ne.s32.totalorder %s41, %s44
      %p50 = scmp.eq.s32.totalorder %s17, 0
      %p51 = por %p49, %p50
      %p52 = scmp.ne.s32.totalorder %s41, %s44
      %p53 = scmp.eq.s32.totalorder %s22, 1
      %p54 = por %p52, %p53
      %p55 = scmp.ne.s32.totalorder %s44, %s45
      %p56 = scmp.eq.s32.totalorder %s22, 0
      %p57 = por %p55, %p56
      %p58 = scmp.ne.s32.totalorder %s44, %s45
      %p59 = scmp.eq.s32.totalorder %s23, 1
      %p60 = por %p58, %p59
      %p62 = scmp.ne.s32.totalorder %s45, %s61
      %p63 = scmp.eq.s32.totalorder %s23, 0
      %p64 = por %p62, %p63
      %s66 = sadd.s32 %s65, 1
      %p69 = scmp.eq.s32.totalorder %s17, 1
      %p70 = scmp.ne.s32.totalorder %s65, %s67
      %p71 = scmp.eq.s32.totalorder %s17, 0
      %p72 = por %p70, %p71
      %p73 = scmp.ne.s32.totalorder %s65, %s67
      %p74 = scmp.eq.s32.totalorder %s22, 1
      %p75 = por %p73, %p74
      %p76 = scmp.ne.s32.totalorder %s67, %s68
      %p77 = scmp.eq.s32.totalorder %s22, 0
      %p78 = por %p76, %p77
      %p79 = scmp.ne.s32.totalorder %s67, %s68
      %p80 = scmp.eq.s32.totalorder %s23, 1
      %p81 = por %p79, %p80
      %p83 = scmp.ne.s32.totalorder %s68, %s82
      %p84 = scmp.eq.s32.totalorder %s23, 0
      %p85 = por %p83, %p84
      %s87 = sadd.s32 %s86, 1
      %p90 = scmp.eq.s32.totalorder %s17, 1
      %p91 = scmp.ne.s32.totalorder %s86, %s88
      %p92 = scmp.eq.s32.totalorder %s17, 0
      %p93 = por %p91, %p92
      %p94 = scmp.ne.s32.totalorder %s86, %s88
      %p95 = scmp.eq.s32.totalorder %s22, 1
      %p96 = por %p94, %p95
      %p97 = scmp.ne.s32.totalorder %s88, %s89
      %p98 = scmp.eq.s32.totalorder %s22, 0
      %p99 = por %p97, %p98
      %p100 = scmp.ne.s32.totalorder %s88, %s89
      %p101 = scmp.eq.s32.totalorder %s23, 1
      %p102 = por %p100, %p101
      %p104 = scmp.ne.s32.totalorder %s89, %s103
      %p105 = scmp.eq.s32.totalorder %s23, 0
      %p106 = por %p104, %p105
      %s108 = sadd.s32 %s107, 1
      %p111 = scmp.eq.s32.totalorder %s17, 1
      %p112 = scmp.ne.s32.totalorder %s107, %s109
      %p113 = scmp.eq.s32.totalorder %s17, 0
      %p114 = por %p112, %p113
      %p115 = scmp.ne.s32.totalorder %s107, %s109
      %p116 = scmp.eq.s32.totalorder %s22, 1
      %p117 = por %p115, %p116
      %p118 = scmp.ne.s32.totalorder %s109, %s110
      %p119 = scmp.eq.s32.totalorder %s22, 0
      %p120 = por %p118, %p119
      %p121 = scmp.ne.s32.totalorder %s109, %s110
      %p122 = scmp.eq.s32.totalorder %s23, 1
      %p123 = por %p121, %p122
      %p125 = scmp.ne.s32.totalorder %s110, %s124
      %p126 = scmp.eq.s32.totalorder %s23, 0
      %p127 = por %p125, %p126
      %s128 = ssub.s32 %s24, %s36
      %p129 = scmp.eq.s32.totalorder %s128, 0
      %s131 = sadd.s32 %s130, 1
      %s132 = scalar_select %p129, %s130, %s131
      %p135 = pneg %p129
      %p136 = scmp.eq.s32.totalorder %s17, 1
      %p137 = por %p135, %p136
      %p138 = scmp.ne.s32.totalorder %s130, %s133
      %p139 = scmp.eq.s32.totalorder %s17, 0
      %p140 = por %p138, %p139
      %p141 = scmp.ne.s32.totalorder %s130, %s133
      %p142 = scmp.eq.s32.totalorder %s22, 1
      %p143 = por %p141, %p142
      %p144 = scmp.ne.s32.totalorder %s133, %s134
      %p145 = scmp.eq.s32.totalorder %s22, 0
      %p146 = por %p144, %p145
      %p147 = scmp.ne.s32.totalorder %s133, %s134
      %p148 = scmp.eq.s32.totalorder %s23, 1
      %p149 = por %p147, %p148
      %p151 = scmp.ne.s32.totalorder %s134, %s150
      %p152 = scmp.eq.s32.totalorder %s23, 0
      %p153 = por %p151, %p152
      %p154 = scmp.le.s32.totalorder 1, %s17
      %p155 = scmp.lt.s32.totalorder %s17, 3
      %p156 = pnand %p154, %p155
      %p157 = pneg %p156
      // Predicated region
      $region9: #{tpu_custom_call.1} parent=5 // pred_check
        _
      $region10: #{tpu_custom_call.1} parent=5 // pred_check_branch
        %159 = sbr.rel (%p156) target = $region12
      $region11: #{tpu_custom_call.1} parent=5 // pred_region
        %s160 = ssub.s32 %s17, 1
        // Predicated region
        $region13: #{tpu_custom_call.1} parent=11 // pred_check
          %p161 = pneg %p78
        $region14: #{tpu_custom_call.1} parent=11 // pred_check_branch
          %163 = sbr.rel (%p161) target = $region16
        $region15: #{tpu_custom_call.1} parent=11 // pred_region
          %s165 = ssub.s32 2048, 2048
          %166 = vsyncadd [#allocation6], %s165
          %s167 = sshll.u32 [#allocation5], 4
          %s168 = int_to_ptr.vmem [resolvable:$true] %s167
          %173 = dma.hbm_to_vmem [thread:$0]  %s1, 2048, %s168, [#allocation6], 128, 128, 8
        $region16: #{tpu_custom_call.1} parent=11 // pred_fallthru
          _
        // Predicated region
        $region17: #{tpu_custom_call.1} parent=11 // pred_check
          %p174 = pneg %p99
        $region18: #{tpu_custom_call.1} parent=11 // pred_check_branch
          %176 = sbr.rel (%p174) target = $region20
        $region19: #{tpu_custom_call.1} parent=11 // pred_region
          _
        $region20: #{tpu_custom_call.1} parent=11 // pred_fallthru
          _
        // Predicated region
        $region21: #{tpu_custom_call.1} parent=11 // pred_check
          %p177 = pneg %p120
        $region22: #{tpu_custom_call.1} parent=11 // pred_check_branch
          %179 = sbr.rel (%p177) target = $region24
        $region23: #{tpu_custom_call.1} parent=11 // pred_region
          _
        $region24: #{tpu_custom_call.1} parent=11 // pred_fallthru
          _
      $region12: #{tpu_custom_call.1} parent=5 // pred_fallthru
        _
      %p180 = scmp.lt.s32.totalorder %s17, 2
      // Predicated region
      $region25: #{tpu_custom_call.1} parent=5 // pred_check
        %p181 = pneg %p180
      $region26: #{tpu_custom_call.1} parent=5 // pred_check_branch
        %183 = sbr.rel (%p181) target = $region28
      $region27: #{tpu_custom_call.1} parent=5 // pred_region
        // Predicated region
        $region29: #{tpu_custom_call.1} parent=27 // pred_check
          %p184 = pneg %p51
        $region30: #{tpu_custom_call.1} parent=27 // pred_check_branch
          %186 = sbr.rel (%p184) target = $region32
        $region31: #{tpu_custom_call.1} parent=27 // pred_region
          %s187 = sand.u32 %s41, 1
          %s188 = scalar_lea.sflag [#allocation3], %s187
          %s189 = sand.u32 %s41, 1
          %s190 = smul.addr %s189, 8
          %s191 = scalar_lea.vmem [#allocation2], %s190
          %s192 = sadd.s32 %s24, %s25
          %s193 = smul.u32 2, %s192
          %s195 = ssub.s32 128, 128
          %196 = vsyncadd %s188, %s195
          %s197 = smul.addr %s193, 64
          %s198 = scalar_lea.hbm %s0, %s197
          %s199 = sshll.u32 %s191, 4
          %s200 = int_to_ptr.vmem [resolvable:$true] %s199
          %205 = dma.hbm_to_vmem [thread:$0]  %s198, 128, %s200, %s188, 64, 64, 4
        $region32: #{tpu_custom_call.1} parent=27 // pred_fallthru
          _
      $region28: #{tpu_custom_call.1} parent=5 // pred_fallthru
        _
      %p206 = scmp.le.s32.totalorder 1, %s17
      %p207 = scmp.lt.s32.totalorder %s17, 3
      %p208 = pnand %p206, %p207
      %p209 = pneg %p208
      // Predicated region
      $region33: #{tpu_custom_call.1} parent=5 // pred_check
        _
      $region34: #{tpu_custom_call.1} parent=5 // pred_check_branch
        %211 = sbr.rel (%p208) target = $region36
      $region35: #{tpu_custom_call.1} parent=5 // pred_region
        %s212 = ssub.s32 %s17, 1
        %s213 = sand.u32 %s44, 1
        %s214 = scalar_lea.sflag [#allocation3], %s213
        %s215 = sand.u32 %s44, 1
        %s216 = smul.addr %s215, 8
        %s217 = scalar_lea.vmem [#allocation2], %s216
        // Predicated region
        $region37: #{tpu_custom_call.1} parent=35 // pred_check
          %p218 = pneg %p57
        $region38: #{tpu_custom_call.1} parent=35 // pred_check_branch
          %220 = sbr.rel (%p218) target = $region40
        $region39: #{tpu_custom_call.1} parent=35 // pred_region
          %221 = dma.done %s214, 128
        $region40: #{tpu_custom_call.1} parent=35 // pred_fallthru
          _
        // Predicated region
        $region41: #{tpu_custom_call.1} parent=35 // pred_check
          %p222 = pneg %p78
        $region42: #{tpu_custom_call.1} parent=35 // pred_check_branch
          %224 = sbr.rel (%p222) target = $region44
        $region43: #{tpu_custom_call.1} parent=35 // pred_region
          %225 = dma.done [#allocation6], 2048
        $region44: #{tpu_custom_call.1} parent=35 // pred_fallthru
          _
        %s226 = sand.u32 %s44, 1
        %s227 = scalar_lea.sflag [#allocation3], %s226
        %s228 = sand.u32 %s44, 1
        %s229 = smul.addr %s228, 8
        %s230 = scalar_lea.vmem [#allocation2], %s229
        %p231 = pneg %p57
        %p232 = pneg %p54
        %p233 = pneg %p78
        %p234 = pneg %p75
        %p235 = pneg %p99
        %p236 = pneg %p96
        %p237 = pneg %p120
        %p238 = pneg %p117
        %p239 = pneg %p146
        %p240 = pneg %p143
        %s241 = sand.u32 %s133, 1
        %s242 = scalar_lea.sflag [#allocation4], %s241
        %s243 = sand.u32 %s133, 1
        %s244 = smul.addr %s243, 48
        %s245 = scalar_lea.vmem [#allocation7], %s244
        %s246 = sadd.s32 %s26, %s27
        %s247 = smul.u32 2, %s246
        %p249 = scmp.eq.s32.totalorder %s27, 0
        // Predicated region
        $region45: #{tpu_custom_call.1} parent=35 // pred_check
          %p250 = pneg %p249
        $region46: #{tpu_custom_call.1} parent=35 // pred_check_branch
          %252 = sbr.rel (%p250) target = $region48
        $region47: #{tpu_custom_call.1} parent=35 // pred_region
          %253 = vst [vmem:[%s245] sm:$0xff] 0.0
          %254 = vst [vmem:[%s245 + $0x8] sm:$0xff] 0.0
          %255 = vst [vmem:[%s245 + $0x10] sm:$0xff] 0.0
          %256 = vst [vmem:[%s245 + $0x18] sm:$0xff] 0.0
          %257 = vst [vmem:[%s245 + $0x20] sm:$0xff] 0.0
          %258 = vst [vmem:[%s245 + $0x28] sm:$0xff] 0.0
        $region48: #{tpu_custom_call.1} parent=35 // pred_fallthru
          _
        %v259 = vld [vmem:[%s217] sm:$0xf]
        %v260 = vld [vmem:[%s217 + $0x4] sm:$0xf]
        %v261 = vld [vmem:[#allocation5] sm:$0xff]
        %v262 = vld [vmem:[#allocation5 + $0x8] sm:$0xff]
        %v263 = vld [vmem:[#allocation5 + $0x10] sm:$0xff]
        %v264 = vld [vmem:[#allocation5 + $0x18] sm:$0xff]
        %v265 = vld [vmem:[#allocation5 + $0x20] sm:$0xff]
        %v266 = vld [vmem:[#allocation5 + $0x28] sm:$0xff]
        %v267 = vld [vmem:[#allocation5 + $0x30] sm:$0xff]
        %v268 = vld [vmem:[#allocation5 + $0x38] sm:$0xff]
        %v269 = vld [vmem:[#allocation5 + $0x40] sm:$0xff]
        %v270 = vld [vmem:[#allocation5 + $0x48] sm:$0xff]
        %v271 = vld [vmem:[#allocation5 + $0x50] sm:$0xff]
        %v272 = vld [vmem:[#allocation5 + $0x58] sm:$0xff]
        %v273 = vld [vmem:[#allocation5 + $0x60] sm:$0xff]
        %v274 = vld [vmem:[#allocation5 + $0x68] sm:$0xff]
        %v275 = vld [vmem:[#allocation5 + $0x70] sm:$0xff]
        %v276 = vld [vmem:[#allocation5 + $0x78] sm:$0xff]
        %v277 = vld [vmem:[%s2] sm:$0x3]
        %v279 = vlaneseq
        %v280 = vshrl.u32 %v279, 7
        %v281 = vsub.s32 0, %v280
        %v282 = vrot.slane %v277, %v281
        %v283 = vlaneseq
        %v284 = vshrl.u32 %v283, 7
        %v285 = vsub.s32 1, %v284
        %v286 = vrot.slane %v277, %v285
        %v291 = vunpack.c.l.b16 %v259
        %v292 = vunpack.c.l.b16 %v260
        %v293 = vpack.c.b16 %v292, %v291
        %v311 = vunpack.c.l.b16 %v261
        %v312 = vunpack.c.h.b16 %v261
        %v313 = vunpack.c.l.b16 %v262
        %v314 = vunpack.c.h.b16 %v262
        %v315 = vunpack.c.l.b16 %v263
        %v316 = vunpack.c.h.b16 %v263
        %v317 = vunpack.c.l.b16 %v264
        %v318 = vunpack.c.h.b16 %v264
        %v319 = vunpack.c.l.b16 %v265
        %v320 = vunpack.c.h.b16 %v265
        %v321 = vunpack.c.l.b16 %v266
        %v322 = vunpack.c.h.b16 %v266
        %v323 = vunpack.c.l.b16 %v267
        %v324 = vunpack.c.h.b16 %v267
        %v325 = vunpack.c.l.b16 %v268
        %v326 = vunpack.c.h.b16 %v268
        %v327 = vunpack.c.l.b16 %v269
        %v328 = vunpack.c.h.b16 %v269
        %v329 = vunpack.c.l.b16 %v270
        %v330 = vunpack.c.h.b16 %v270
        %v331 = vunpack.c.l.b16 %v271
        %v332 = vunpack.c.h.b16 %v271
        %v333 = vunpack.c.l.b16 %v272
        %v334 = vunpack.c.h.b16 %v272
        %v335 = vunpack.c.l.b16 %v273
        %v336 = vunpack.c.h.b16 %v273
        %v337 = vunpack.c.l.b16 %v274
        %v338 = vunpack.c.h.b16 %v274
        %v339 = vunpack.c.l.b16 %v275
        %v340 = vunpack.c.h.b16 %v275
        %v341 = vunpack.c.l.b16 %v276
        %v342 = vunpack.c.h.b16 %v276
        %v343 = vpack.c.b16 %v313, %v311
        %v344 = vpack.c.b16 %v314, %v312
        %v345 = vpack.c.b16 %v317, %v315
        %v346 = vpack.c.b16 %v318, %v316
        %v347 = vpack.c.b16 %v321, %v319
        %v348 = vpack.c.b16 %v322, %v320
        %v349 = vpack.c.b16 %v325, %v323
        %v350 = vpack.c.b16 %v326, %v324
        %v351 = vpack.c.b16 %v329, %v327
        %v352 = vpack.c.b16 %v330, %v328
        %v353 = vpack.c.b16 %v333, %v331
        %v354 = vpack.c.b16 %v334, %v332
        %v355 = vpack.c.b16 %v337, %v335
        %v356 = vpack.c.b16 %v338, %v336
        %v357 = vpack.c.b16 %v341, %v339
        %v358 = vpack.c.b16 %v342, %v340
        %375 = vmatprep.subr.bf16.mxu0 %v344
        %376 = vmatpush1.bf16.msra.mxu0 %v343
        %377 = vmatprep.subr.bf16.mxu0 %v346
        %378 = vmatpush1.bf16.msra.mxu0 %v345
        %379 = vmatprep.subr.bf16.mxu0 %v348
        %380 = vmatpush1.bf16.msra.mxu0 %v347
        %381 = vmatprep.subr.bf16.mxu0 %v350
        %382 = vmatpush1.bf16.msra.mxu0 %v349
        %383 = vmatprep.subr.bf16.mxu0 %v352
        %384 = vmatpush1.bf16.msra.mxu0 %v351
        %385 = vmatprep.subr.bf16.mxu0 %v354
        %386 = vmatpush1.bf16.msra.mxu0 %v353
        %387 = vmatprep.subr.bf16.mxu0 %v356
        %388 = vmatpush1.bf16.msra.mxu0 %v355
        %389 = vmatprep.subr.bf16.mxu0 %v358
        %390 = vmatpush1.bf16.msra.mxu0 %v357
        %391 = vmatprep.subr.bf16.mxu0 0
        %392 = vmatpush1.bf16.msra.mxu0 0
        %393 = vmatprep.subr.bf16.mxu0 0
        %394 = vmatpush1.bf16.msra.mxu0 0
        %395 = vmatprep.subr.bf16.mxu0 0
        %396 = vmatpush1.bf16.msra.mxu0 0
        %397 = vmatprep.subr.bf16.mxu0 0
        %398 = vmatpush1.bf16.msra.mxu0 0
        %399 = vmatprep.subr.bf16.mxu0 0
        %400 = vmatpush1.bf16.msra.mxu0 0
        %401 = vmatprep.subr.bf16.mxu0 0
        %402 = vmatpush1.bf16.msra.mxu0 0
        %403 = vmatprep.subr.bf16.mxu0 0
        %404 = vmatpush1.bf16.msra.mxu0 0
        %405 = vmatprep.subr.bf16.mxu0 0
        %406 = vmatpush1.bf16.msra.mxu0 0
        %407 = vmatprep.mubr.bf16.mxu0 0
        %408 = vmatmul.mubr.bf16.gmra.mrb[0].mxu0 %v293
        %v409 = vpop.f32.mrb[0].mxu0
        %v410 = vadd.f32 %v282, %v409
        %v411 = vpop.f32.mrb[0].mxu0
        %v412 = vadd.f32 %v286, %v411
        %v413 = vpop.f32.mrb[0].mxu0
        %v414 = vadd.f32 %v282, %v413
        %v415 = vpop.f32.mrb[0].mxu0
        %v416 = vadd.f32 %v286, %v415
        %417 = vdwg.mxu0
        %s418 = sadd.s32 %s26, %s27
        %s419 = smul.u32 %s418, 16
        %v420 = vlaneseq
        %v421 = vshrl.u32 %v420, 7
        %v422 = vadd.s32 %v421, 8
        %v423 = vstv %s419
        %v424 = vadd.s32 %v423, %v421
        %v425 = vadd.s32 %v423, %v422
        %vm426 = vcmp.lt.s32.totalorder %v424, 32
        %vm427 = vcmp.lt.s32.totalorder %v425, 32
        %v428 = vld [vmem:[%s3] sm:$0x3]
        %v430 = vlaneseq
        %v431 = vshrl.u32 %v430, 7
        %v432 = vsub.s32 0, %v431
        %v433 = vrot.slane %v428, %v432
        %v434 = vlaneseq
        %v435 = vshrl.u32 %v434, 7
        %v436 = vsub.s32 1, %v435
        %v437 = vrot.slane %v428, %v436
        %v440 = vsub.f32 %v410, %v433
        %v441 = vsub.f32 %v412, %v437
        %v442 = vsub.f32 %v414, %v433
        %v443 = vsub.f32 %v416, %v437
        %v444 = vmul.f32 %v440, %v440
        %v445 = vmul.f32 %v441, %v441
        %v446 = vmul.f32 %v442, %v442
        %v447 = vmul.f32 %v443, %v443
        %v448 = vsel %vm426, %v444, 0.0
        %v449 = vsel %vm426, %v445, 0.0
        %v450 = vsel %vm427, %v446, 0.0
        %v451 = vsel %vm427, %v447, 0.0
        %v452 = vand.u32 2147483647, %v440
        %v453 = vand.u32 2147483647, %v441
        %v454 = vand.u32 2147483647, %v442
        %v455 = vand.u32 2147483647, %v443
        %v456 = vsel %vm426, %v452, 0.0
        %v457 = vsel %vm426, %v453, 0.0
        %v458 = vsel %vm427, %v454, 0.0
        %v459 = vsel %vm427, %v455, 0.0
        %v460 = vxor.u32 %v410, 2147483648
        %v461 = vxor.u32 %v412, 2147483648
        %v462 = vxor.u32 %v414, 2147483648
        %v463 = vxor.u32 %v416, 2147483648
        %v464 = vmul.f32 %v460, 1.442695
        %v465 = vpow.pop %v464
        %v466 = vmul.f32 %v461, 1.442695
        %v467 = vpow.pop %v466
        %v468 = vmul.f32 %v462, 1.442695
        %v469 = vpow.pop %v468
        %v470 = vmul.f32 %v463, 1.442695
        %v471 = vpow.pop %v470
        %v472 = vadd.f32 %v465, 1.0
        %v473 = vadd.f32 %v467, 1.0
        %v474 = vadd.f32 %v469, 1.0
        %v475 = vadd.f32 %v471, 1.0
        %v476 = vrcp.pop %v472
        %v477 = vmul.f32 1.0, %v476
        %v478 = vrcp.pop %v473
        %v479 = vmul.f32 1.0, %v478
        %v480 = vrcp.pop %v474
        %v481 = vmul.f32 1.0, %v480
        %v482 = vrcp.pop %v475
        %v483 = vmul.f32 1.0, %v482
        %v484 = vmul.f32 %v477, %v477
        %v485 = vmul.f32 %v479, %v479
        %v486 = vmul.f32 %v481, %v481
        %v487 = vmul.f32 %v483, %v483
        %v488 = vsel %vm426, %v484, 0.0
        %v489 = vsel %vm426, %v485, 0.0
        %v490 = vsel %vm427, %v486, 0.0
        %v491 = vsel %vm427, %v487, 0.0
        %v492 = vadd.f32 %v448, %v450
        %v493 = vadd.f32 %v449, %v451
        %v494 = vadd.f32 %v456, %v458
        %v495 = vadd.f32 %v457, %v459
        %v496 = vadd.f32 %v488, %v490
        %v497 = vadd.f32 %v489, %v491
        %v498 = vld [vmem:[%s245] sm:$0xff]
        %v499 = vld [vmem:[%s245 + $0x8] sm:$0xff]
        %v500 = vld [vmem:[%s245 + $0x10] sm:$0xff]
        %v501 = vld [vmem:[%s245 + $0x18] sm:$0xff]
        %v502 = vld [vmem:[%s245 + $0x20] sm:$0xff]
        %v503 = vld [vmem:[%s245 + $0x28] sm:$0xff]
        %v504 = vadd.f32 %v498, %v492
        %v505 = vadd.f32 %v499, %v493
        %v506 = vadd.f32 %v500, %v494
        %v507 = vadd.f32 %v501, %v495
        %v508 = vadd.f32 %v502, %v496
        %v509 = vadd.f32 %v503, %v497
        %510 = vst [vmem:[%s245] sm:$0xff] %v504
        %511 = vst [vmem:[%s245 + $0x8] sm:$0xff] %v505
        %512 = vst [vmem:[%s245 + $0x10] sm:$0xff] %v506
        %513 = vst [vmem:[%s245 + $0x18] sm:$0xff] %v507
        %514 = vst [vmem:[%s245 + $0x20] sm:$0xff] %v508
        %515 = vst [vmem:[%s245 + $0x28] sm:$0xff] %v509
        %s516 = sand.u32 %s133, 1
        %s517 = scalar_lea.sflag [#allocation4], %s516
        %s518 = sand.u32 %s133, 1
        %s519 = smul.addr %s518, 48
        %s520 = scalar_lea.vmem [#allocation7], %s519
        // Predicated region
        $region49: #{tpu_custom_call.1} parent=35 // pred_check
          %p521 = pneg %p143
        $region50: #{tpu_custom_call.1} parent=35 // pred_check_branch
          %523 = sbr.rel (%p521) target = $region52
        $region51: #{tpu_custom_call.1} parent=35 // pred_region
          %s525 = ssub.s32 768, 768
          %526 = vsyncadd %s517, %s525
          %s527 = smul.addr %s26, 6
          %s528 = smul.addr %s527, 128
          %s529 = scalar_lea.hbm %s4, %s528
          %s530 = sshll.u32 %s520, 4
          %s531 = int_to_ptr.vmem [resolvable:$true] %s530
          %536 = dma.vmem_to_hbm [thread:$0]  %s531, 768, %s529, %s517, 256, 256, 16
        $region52: #{tpu_custom_call.1} parent=35 // pred_fallthru
          _
      $region36: #{tpu_custom_call.1} parent=5 // pred_fallthru
        _
      %p537 = scmp.le.s32.totalorder 2, %s17
      // Predicated region
      $region53: #{tpu_custom_call.1} parent=5 // pred_check
        %p538 = pneg %p537
      $region54: #{tpu_custom_call.1} parent=5 // pred_check_branch
        %540 = sbr.rel (%p538) target = $region56
      $region55: #{tpu_custom_call.1} parent=5 // pred_region
        %s541 = ssub.s32 %s17, 2
        // Predicated region
        $region57: #{tpu_custom_call.1} parent=55 // pred_check
          %p542 = pneg %p149
        $region58: #{tpu_custom_call.1} parent=55 // pred_check_branch
          %544 = sbr.rel (%p542) target = $region60
        $region59: #{tpu_custom_call.1} parent=55 // pred_region
          %s545 = sand.u32 %s134, 1
          %s546 = scalar_lea.sflag [#allocation4], %s545
          %s547 = sand.u32 %s134, 1
          %s548 = smul.addr %s547, 48
          %s549 = scalar_lea.vmem [#allocation7], %s548
          %550 = dma.done %s546, 768
        $region60: #{tpu_custom_call.1} parent=55 // pred_fallthru
          _
      $region56: #{tpu_custom_call.1} parent=5 // pred_fallthru
        _
    $region6: #{tpu_custom_call.1} parent=1 // loop_footer
      %s21 = sadd.s32 1, %s17
    $region7: #{tpu_custom_call.1} parent=1 // loop_footer_branch
      %16 = sbr.rel target = $region3
    $region8: #{tpu_custom_call.1} parent=1 // loop_exit
      _
    %551 = vsyncpa [#allocation3], 1
    %s552 = scalar_lea.sflag [#allocation3], 1
    %553 = vsyncpa %s552, 1
    %554 = vsyncpa [#allocation6], 1
    %555 = vsyncpa [#allocation4], 1
    %s556 = scalar_lea.sflag [#allocation4], 1
    %557 = vsyncpa %s556, 1

</llo_original>
